<compile_context>
chip_gen: v6e
topology: v6e:2x2x1
jax: 0.10.0
libtpu: 0.0.40
codegen_flags: <defaults>
</compile_context>

<pallas_src>
import functools

import numpy as np
import jax
import jax.numpy as jnp
from jax import lax
from jax.experimental import pallas as pl
from jax.experimental.pallas import tpu as pltpu

PAD = 3                 # H padding of the 7-tap branch
TAPS = 2 * PAD + 1      # 7


def _lkrb_kernel(x_ref, w_ref, b_ref, o_ref, col_ref, *, width):
    """One block of `nb` images per grid step.

    x_ref  : (nb, CP, L)   input, lane dim = H*W (lane dense), CP sublane-padded
    w_ref  : (CP, 7*CP)    folded conv+BN weights in im2col layout
    b_ref  : (CP, 1) f32   fused bias (b7 + b3), zero in padded rows
    o_ref  : (nb, CP, L)   output
    col_ref: (7*CP, L)     VMEM im2col scratch (dtype == compute dtype)
    """
    nb, cp, L = x_ref.shape
    H = L // width

    # Clear once per grid step: the halo strips (and padded channel rows) of
    # col_ref are never written below and are identical for every image in the
    # block, so a single full clear keeps them zero for the whole step.  (Do NOT
    # guard this with pl.when(program_id == 0): under megacore sharding of the
    # "parallel" axis a core may never execute step 0.)
    col_ref[...] = jnp.zeros_like(col_ref)

    for n in range(nb):                                   # nb small & static -> unrolled
        xn = x_ref[n]                                     # (CP, L)
        # Shifted (im2col) stack: row block kh holds x shifted by d = kh - PAD
        # rows, edge-trimmed; a row shift of d is a d*width lane shift in the
        # flattened lane-dense layout.  All slices are static.
        for kh in range(TAPS):
            d = kh - PAD
            lo, hi = max(0, -d), H - max(0, d)
            a, b = lo * width, hi * width
            col_ref[kh * cp:(kh + 1) * cp, a:b] = xn[:, a + d * width:b + d * width]

        # Single MXU matmul with the 7-tap reduction folded into the contraction
        # (K = 7*CP), f32 accumulation.  Bias + SiLU fused on the result in
        # vregs; the output is written exactly once.
        y = jnp.dot(w_ref[...], col_ref[...], preferred_element_type=jnp.float32)
        y = y + b_ref[...]                                # (CP, L) + (CP, 1)
        y = y * jax.nn.sigmoid(y)                         # SiLU, f32
        o_ref[n] = y.astype(o_ref.dtype)


def _images_per_step(n_images, cap=8):
    """Amortize per-grid-step overhead, but keep >= 2 'parallel' grid steps so
    both v7x TensorCores get work (measured neutral on v5e/v6e)."""
    best = 1
    for nb in range(1, min(cap, n_images) + 1):
        if n_images % nb == 0 and (n_images // nb >= 2 or n_images == 1):
            best = nb
    return best


def _layout_weights(w_fold, cp):
    """(7, C, C) folded taps -> (CP, 7*CP) im2col matmul weight (zero padded):
    W_all[o, kh*CP + i] = w_fold[kh, o, i]."""
    t, c, _ = w_fold.shape
    w = jnp.zeros((t, cp, cp), w_fold.dtype).at[:, :c, :c].set(w_fold)
    return jnp.transpose(w, (1, 0, 2)).reshape(cp, t * cp)


def large_kernel_rep_block(x, w_fold, bias, *, compute_dtype=None, images_per_step=None):
    """x: (N, C, H, W); w_fold: (7, C, C) rep-folded conv+BN taps; bias: (C,).

    compute_dtype=jnp.bfloat16 is the production setting for v6e/v7x: bf16
    HBM/VMEM storage + bf16 MXU operands, f32 accumulation and f32 epilogue.
    """
    N, C, H, W = x.shape
    L = H * W
    cdt = x.dtype if compute_dtype is None else compute_dtype
    g = 32 // np.dtype(cdt).itemsize            # sublane granularity: 8 f32 / 16 bf16
    CP = ((C + g - 1) // g) * g
    nb = _images_per_step(N) if images_per_step is None else images_per_step

    # Lane-dense (N, CP, H*W) activation layout.  The channel pad is a no-op
    # once C is a multiple of the granularity (production case); at small C it
    # keeps every kernel-side row block sublane-aligned.
    x2d = x.reshape(N, C, L).astype(cdt)
    if CP != C:
        x2d = jnp.pad(x2d, ((0, 0), (0, CP - C), (0, 0)))
    w_all = _layout_weights(w_fold, CP).astype(cdt)            # (CP, 7*CP)
    b2d = jnp.pad(bias.astype(jnp.float32), (0, CP - C)).reshape(CP, 1)

    out = pl.pallas_call(
        functools.partial(_lkrb_kernel, width=W),
        out_shape=jax.ShapeDtypeStruct((N, CP, L), x.dtype),
        grid_spec=pltpu.PrefetchScalarGridSpec(
            num_scalar_prefetch=0,
            grid=(N // nb,),
            in_specs=[
                pl.BlockSpec((nb, CP, L), lambda n: (n, 0, 0)),
                pl.BlockSpec((CP, TAPS * CP), lambda n: (0, 0)),   # VMEM-resident
                pl.BlockSpec((CP, 1), lambda n: (0, 0)),
            ],
            out_specs=pl.BlockSpec((nb, CP, L), lambda n: (n, 0, 0)),
            scratch_shapes=[pltpu.VMEM((TAPS * CP, L), cdt)],
        ),
        compiler_params=pltpu.CompilerParams(
            dimension_semantics=("parallel",),
        ),
    )(x2d, w_all, b2d)
    return out[:, :C, :].reshape(N, C, H, W)


def fold_weights(w7_f, b7, w3_f, b3):
    """Rep-parameterization, done ONCE at weight-prep time (== module.fuse()):
    fold the 3x1 branch into taps 2..4 of the 7x1 branch and fuse the biases.
    Returns the folded taps as (7, C_out, C_in) plus the fused bias."""
    w7_k = jnp.transpose(w7_f[:, :, :, 0], (2, 0, 1))    # (7, O, I)
    w3_k = jnp.transpose(w3_f[:, :, :, 0], (2, 0, 1))    # (3, O, I)
    w_fold = w7_k.at[PAD - 1:PAD + 2].add(w3_k)          # taps 2,3,4
    return w_fold, b7 + b3


def init_params(key, C):
    """Deterministic synthetic params: Conv2d weights + folded BatchNorm (eval mode)."""
    ks = jax.random.split(key, 10)
    eps = 1e-3

    # conv: Conv2d(C, C, (7,1), bias=False) + BN
    w7_raw = 0.1 * jax.random.normal(ks[0], (C, C, 7, 1), jnp.float32)   # OIHW
    g7 = 1.0 + 0.1 * jax.random.normal(ks[1], (C,), jnp.float32)
    beta7 = 0.1 * jax.random.normal(ks[2], (C,), jnp.float32)
    m7 = 0.1 * jax.random.normal(ks[3], (C,), jnp.float32)
    v7 = jnp.abs(jax.random.normal(ks[4], (C,), jnp.float32)) + 0.5

    # conv1: Conv2d(C, C, (3,1), bias=False) + BN
    w3_raw = 0.1 * jax.random.normal(ks[5], (C, C, 3, 1), jnp.float32)   # OIHW
    g3 = 1.0 + 0.1 * jax.random.normal(ks[6], (C,), jnp.float32)
    beta3 = 0.1 * jax.random.normal(ks[7], (C,), jnp.float32)
    m3 = 0.1 * jax.random.normal(ks[8], (C,), jnp.float32)
    v3 = jnp.abs(jax.random.normal(ks[9], (C,), jnp.float32)) + 0.5

    s7 = g7 / jnp.sqrt(v7 + eps)
    s3 = g3 / jnp.sqrt(v3 + eps)
    w7_f = w7_raw * s7[:, None, None, None]          # fused conv+BN weights (OIHW)
    w3_f = w3_raw * s3[:, None, None, None]
    b7 = beta7 - m7 * s7
    b3 = beta3 - m3 * s3
    return w7_f, b7, w3_f, b3


def ref_forward(x, w7_f, b7, w3_f, b3):
    dn = ('NCHW', 'OIHW', 'NCHW')
    y7 = lax.conv_general_dilated(x, w7_f, (1, 1), ((3, 3), (0, 0)),
                                  dimension_numbers=dn) + b7[None, :, None, None]
    y3 = lax.conv_general_dilated(x, w3_f, (1, 1), ((1, 1), (0, 0)),
                                  dimension_numbers=dn) + b3[None, :, None, None]
    y = y7 + y3
    return y * jax.nn.sigmoid(y)


if __name__ == "__main__":
    key = jax.random.PRNGKey(0)
    kx, kp = jax.random.split(key)

    N, C, H, W = 2, 4, 16, 16
    x = jax.random.normal(kx, (N, C, H, W), jnp.float32)

    w7_f, b7, w3_f, b3 = init_params(kp, C)
    w_fold, bias = fold_weights(w7_f, b7, w3_f, b3)   # one-time rep-parameterization

    ref = jax.block_until_ready(ref_forward(x, w7_f, b7, w3_f, b3))

    # f32 path: exact check against the lax.conv reference.
    out = jax.block_until_ready(large_kernel_rep_block(x, w_fold, bias))
    assert out.shape == (N, C, H, W)
    assert jnp.allclose(out, ref, atol=1e-4, rtol=1e-4), "f32 kernel mismatch vs reference"

    # bf16 storage / bf16-MXU path (production setting for v6e/v7x), f32 accumulate.
    out_bf16 = jax.block_until_ready(
        large_kernel_rep_block(x, w_fold, bias, compute_dtype=jnp.bfloat16))
    assert jnp.allclose(out_bf16, ref, atol=3e-2, rtol=3e-2), "bf16 kernel mismatch vs reference"

    print("KERNEL_OK")
</pallas_src>

<mosaic_0001>
module attributes {stable_mosaic.version = 11 : i64} {
  func.func @_lkrb_kernel(%arg0: i32, %arg1: memref<1x8x256xf32, #tpu.memory_space<vmem>>, %arg2: memref<8x56xf32, #tpu.memory_space<vmem>>, %arg3: memref<8x1xf32, #tpu.memory_space<vmem>>, %arg4: memref<1x8x256xf32, #tpu.memory_space<vmem>>, %arg5: memref<56x256xf32, #tpu.memory_space<vmem>>) attributes {dimension_semantics = [#tpu.dimension_semantics<parallel>], iteration_bounds = array<i64: 2>, scalar_prefetch = 0 : i64, scratch_operands = 1 : i64, tpu.core_type = #tpu.core_type<tc>, window_params = [{transform_indices = @transform_0, window_bounds = array<i64: 1, 8, 256>}, {pipeline_mode = #tpu.pipeline_mode<synchronous>, transform_indices = @transform_1, window_bounds = array<i64: 8, 56>}, {pipeline_mode = #tpu.pipeline_mode<synchronous>, transform_indices = @transform_2, window_bounds = array<i64: 8, 1>}, {transform_indices = @transform_3, window_bounds = array<i64: 1, 8, 256>}]} {
    %cst = arith.constant 0.000000e+00 : f32
    %0 = vector.broadcast %cst : f32 to vector<56x256xf32>
    %c0 = arith.constant 0 : index
    %c0_0 = arith.constant 0 : index
    %1 = vector.load %arg5[%c0, %c0_0] : memref<56x256xf32, #tpu.memory_space<vmem>>, vector<56x256xf32>
    tpu.vector_store %arg5[%c0, %c0_0], %0 {strides = array<i32>} : memref<56x256xf32, #tpu.memory_space<vmem>>, vector<56x256xf32>,
    %c0_1 = arith.constant 0 : index
    %c0_2 = arith.constant 0 : index
    %c0_3 = arith.constant 0 : index
    %2 = vector.load %arg1[%c0_1, %c0_2, %c0_3] : memref<1x8x256xf32, #tpu.memory_space<vmem>>, vector<1x8x256xf32>
    %3 = vector.shape_cast %2 : vector<1x8x256xf32> to vector<8x256xf32>
    %4 = vector.extract_strided_slice %3 {offsets = [0, 0], sizes = [8, 208], strides = [1, 1]} : vector<8x256xf32> to vector<8x208xf32>
    %c0_4 = arith.constant 0 : index
    %c48 = arith.constant 48 : index
    %5 = vector.load %arg5[%c0_4, %c48] : memref<56x256xf32, #tpu.memory_space<vmem>>, vector<8x208xf32>
    tpu.vector_store %arg5[%c0_4, %c48], %4 {strides = array<i32>} : memref<56x256xf32, #tpu.memory_space<vmem>>, vector<8x208xf32>,
    %6 = vector.extract_strided_slice %3 {offsets = [0, 0], sizes = [8, 224], strides = [1, 1]} : vector<8x256xf32> to vector<8x224xf32>
    %c8 = arith.constant 8 : index
    %c32 = arith.constant 32 : index
    %7 = vector.load %arg5[%c8, %c32] : memref<56x256xf32, #tpu.memory_space<vmem>>, vector<8x224xf32>
    tpu.vector_store %arg5[%c8, %c32], %6 {strides = array<i32>} : memref<56x256xf32, #tpu.memory_space<vmem>>, vector<8x224xf32>,
    %8 = vector.extract_strided_slice %3 {offsets = [0, 0], sizes = [8, 240], strides = [1, 1]} : vector<8x256xf32> to vector<8x240xf32>
    %c16 = arith.constant 16 : index
    %c16_5 = arith.constant 16 : index
    %9 = vector.load %arg5[%c16, %c16_5] : memref<56x256xf32, #tpu.memory_space<vmem>>, vector<8x240xf32>
    tpu.vector_store %arg5[%c16, %c16_5], %8 {strides = array<i32>} : memref<56x256xf32, #tpu.memory_space<vmem>>, vector<8x240xf32>,
    %c24 = arith.constant 24 : index
    %c0_6 = arith.constant 0 : index
    %10 = vector.load %arg5[%c24, %c0_6] : memref<56x256xf32, #tpu.memory_space<vmem>>, vector<8x256xf32>
    tpu.vector_store %arg5[%c24, %c0_6], %3 {strides = array<i32>} : memref<56x256xf32, #tpu.memory_space<vmem>>, vector<8x256xf32>,
    %11 = vector.extract_strided_slice %3 {offsets = [0, 16], sizes = [8, 240], strides = [1, 1]} : vector<8x256xf32> to vector<8x240xf32>
    %c32_7 = arith.constant 32 : index
    %c0_8 = arith.constant 0 : index
    %12 = vector.load %arg5[%c32_7, %c0_8] : memref<56x256xf32, #tpu.memory_space<vmem>>, vector<8x240xf32>
    tpu.vector_store %arg5[%c32_7, %c0_8], %11 {strides = array<i32>} : memref<56x256xf32, #tpu.memory_space<vmem>>, vector<8x240xf32>,
    %13 = vector.extract_strided_slice %3 {offsets = [0, 32], sizes = [8, 224], strides = [1, 1]} : vector<8x256xf32> to vector<8x224xf32>
    %c40 = arith.constant 40 : index
    %c0_9 = arith.constant 0 : index
    %14 = vector.load %arg5[%c40, %c0_9] : memref<56x256xf32, #tpu.memory_space<vmem>>, vector<8x224xf32>
    tpu.vector_store %arg5[%c40, %c0_9], %13 {strides = array<i32>} : memref<56x256xf32, #tpu.memory_space<vmem>>, vector<8x224xf32>,
    %15 = vector.extract_strided_slice %3 {offsets = [0, 48], sizes = [8, 208], strides = [1, 1]} : vector<8x256xf32> to vector<8x208xf32>
    %c48_10 = arith.constant 48 : index
    %c0_11 = arith.constant 0 : index
    %16 = vector.load %arg5[%c48_10, %c0_11] : memref<56x256xf32, #tpu.memory_space<vmem>>, vector<8x208xf32>
    tpu.vector_store %arg5[%c48_10, %c0_11], %15 {strides = array<i32>} : memref<56x256xf32, #tpu.memory_space<vmem>>, vector<8x208xf32>,
    %c0_12 = arith.constant 0 : index
    %c0_13 = arith.constant 0 : index
    %17 = vector.load %arg2[%c0_12, %c0_13] : memref<8x56xf32, #tpu.memory_space<vmem>>, vector<8x56xf32>
    %c0_14 = arith.constant 0 : index
    %c0_15 = arith.constant 0 : index
    %18 = vector.load %arg5[%c0_14, %c0_15] : memref<56x256xf32, #tpu.memory_space<vmem>>, vector<56x256xf32>
    %cst_16 = arith.constant dense<0.000000e+00> : vector<8x256xf32>
    %19 = tpu.matmul %17, %18, %cst_16 {dimension_numbers = #tpu.dot_dimension_numbers<[1], [0], [0], [1], [0, 0, 1, 1], [], []>} : vector<8x56xf32>, vector<56x256xf32>, vector<8x256xf32> -> vector<8x256xf32>
    %c0_17 = arith.constant 0 : index
    %c0_18 = arith.constant 0 : index
    %20 = vector.load %arg3[%c0_17, %c0_18] : memref<8x1xf32, #tpu.memory_space<vmem>>, vector<8x1xf32>
    %21 = vector.broadcast %20 : vector<8x1xf32> to vector<8x256xf32>
    %22 = arith.addf %19, %21 : vector<8x256xf32>
    %23 = arith.negf %22 : vector<8x256xf32>
    %24 = math.exp %23 : vector<8x256xf32>
    %cst_19 = arith.constant 1.000000e+00 : f32
    %25 = vector.broadcast %cst_19 : f32 to vector<8x256xf32>
    %26 = arith.addf %25, %24 : vector<8x256xf32>
    %27 = arith.divf %25, %26 : vector<8x256xf32>
    %28 = arith.mulf %22, %27 : vector<8x256xf32>
    %c0_20 = arith.constant 0 : index
    %c0_21 = arith.constant 0 : index
    %c0_22 = arith.constant 0 : index
    %29 = vector.load %arg4[%c0_20, %c0_21, %c0_22] : memref<1x8x256xf32, #tpu.memory_space<vmem>>, vector<1x8x256xf32>
    %30 = vector.shape_cast %29 : vector<1x8x256xf32> to vector<8x256xf32>
    %31 = vector.shape_cast %28 : vector<8x256xf32> to vector<1x8x256xf32>
    tpu.vector_store %arg4[%c0_20, %c0_21, %c0_22], %31 {strides = array<i32>} : memref<1x8x256xf32, #tpu.memory_space<vmem>>, vector<1x8x256xf32>,
    return
  }
  func.func @transform_0(%arg0: i32) -> (i32, i32, i32) {
    %c0_i32 = arith.constant 0 : i32
    %c0_i32_0 = arith.constant 0 : i32
    %c0_i32_1 = arith.constant 0 : i32
    return %arg0, %c0_i32, %c0_i32_0 : i32, i32, i32
  }
  func.func @transform_1(%arg0: i32) -> (i32, i32) {
    %c0_i32 = arith.constant 0 : i32
    %c0_i32_0 = arith.constant 0 : i32
    %c0_i32_1 = arith.constant 0 : i32
    return %c0_i32, %c0_i32_0 : i32, i32
  }
  func.func @transform_2(%arg0: i32) -> (i32, i32) {
    %c0_i32 = arith.constant 0 : i32
    %c0_i32_0 = arith.constant 0 : i32
    %c0_i32_1 = arith.constant 0 : i32
    return %c0_i32, %c0_i32_0 : i32, i32
  }
  func.func @transform_3(%arg0: i32) -> (i32, i32, i32) {
    %c0_i32 = arith.constant 0 : i32
    %c0_i32_0 = arith.constant 0 : i32
    %c0_i32_1 = arith.constant 0 : i32
    return %arg0, %c0_i32, %c0_i32_0 : i32, i32, i32
  }
}

</mosaic_0001>

<llo_original>
// kernel: tpu_custom_call.1
$region0: #{tpu_custom_call.1}
  #allocation0 [shape = 'u32[]', space=smem, size = 0x4, offset = 0x4, fixed_abs, tag = 'smem constant byte address 0x4 - core index']
  #allocation1 [shape = 'u32[144,128]{1,0:T(1,128)}', space=vmem, size = 0x12000, scoped, tag = 'internal scratch']
  #allocation2 [shape = 'f32[56,256]{1,0:T(8,128)}', space=vmem, size = 0xe000, scoped, tag = 'scratch operand']
  %s0 = inlined_call_operand.hbm [shape: f32[2,8,256], index: 0, kind: input, shape index: {}]
  %s1 = inlined_call_operand.vmem [shape: f32[8,56], index: 1, kind: input, shape index: {}]
  %s2 = inlined_call_operand.vmem [shape: f32[8,1], index: 2, kind: input, shape index: {}]
  %s3 = inlined_call_operand.hbm [shape: f32[2,8,256], index: 3, kind: output, shape index: {}]
  %s4 = sld [smem:[#allocation0]]
  $region49: #{tpu_custom_call.1} parent=0
    _
  %s6 = ssub.s32 1, %s4
  %s7 = scalar_select 0, %s6, %s4
  $region1: #{tpu_custom_call.1} parent=0
    #allocation3 [shape = 'u8[16384]{0}', space=vmem, size = 0x4000, scoped, tag = 'input window, operand 0']
    #allocation4 [shape = 's32[2]{0}', space=sflag, size = 0x8, scoped, tag = 'scoped memory for tpu_custom_call.1']
    #allocation5 [shape = 's32[2]{0}', space=sflag, size = 0x8, scoped, tag = 'scoped memory for tpu_custom_call.1']
    #allocation6 [shape = 'u8[16384]{0}', space=vmem, size = 0x4000, scoped, tag = 'output window, operand 0']
    %8 = vsyncpa [#allocation4], 0
    %s9 = scalar_lea.sflag [#allocation4], 1
    %10 = vsyncpa %s9, 0
    %11 = vsyncpa [#allocation5], 0
    %s12 = scalar_lea.sflag [#allocation5], 1
    %13 = vsyncpa %s12, 0
    loop: start=0, step=1, limit=4
    $region2: #{tpu_custom_call.1} parent=1 // loop_pre_header
      _
    $region3: #{tpu_custom_call.1} parent=1 // loop_header
      %s15 = sphi 0, %s19
      %p16 = scmp.ge.s32.totalorder %s15, 4
      %s25 = sphi 0, %s27
      %s28 = sphi 0, %s25
      %s29 = sphi 0, %s28
      %s45 = sphi 0, %s29
      %s49 = sphi 0, %s49
      %s51 = sphi 0, %s49
      %s52 = sphi 0, %s51
      %s66 = sphi 0, %s52
      %s70 = sphi 0, %s70
      %s72 = sphi 0, %s70
      %s73 = sphi 0, %s72
      %s87 = sphi 0, %s73
      %s93 = sphi 0, %s95
      %s96 = sphi 0, %s93
      %s97 = sphi 0, %s96
      %s113 = sphi 0, %s97
    $region4: #{tpu_custom_call.1} parent=1 // loop_header_branch
      %18 = sbr.rel (%p16) target = $region8
    $region5: #{tpu_custom_call.1} parent=1 // loop_body
      %s20 = ssub.s32 %s15, 1
      %s21 = ssub.s32 %s15, 2
      %s22 = sadd.s32 %s15, 1
      %s23 = ssub.s32 %s15, %s22
      %p24 = scmp.eq.s32.totalorder %s23, 0
      %s26 = sadd.s32 %s25, 1
      %s27 = scalar_select %p24, %s25, %s26
      %p30 = pneg %p24
      %p31 = scmp.eq.s32.totalorder %s15, 1
      %p32 = por %p30, %p31
      %p33 = scmp.ne.s32.totalorder %s25, %s28
      %p34 = scmp.eq.s32.totalorder %s15, 0
      %p35 = por %p33, %p34
      %p36 = scmp.ne.s32.totalorder %s25, %s28
      %p37 = scmp.eq.s32.totalorder %s20, 1
      %p38 = por %p36, %p37
      %p39 = scmp.ne.s32.totalorder %s28, %s29
      %p40 = scmp.eq.s32.totalorder %s20, 0
      %p41 = por %p39, %p40
      %p42 = scmp.ne.s32.totalorder %s28, %s29
      %p43 = scmp.eq.s32.totalorder %s21, 1
      %p44 = por %p42, %p43
      %p46 = scmp.ne.s32.totalorder %s29, %s45
      %p47 = scmp.eq.s32.totalorder %s21, 0
      %p48 = por %p46, %p47
      %s50 = sadd.s32 %s49, 1
      %p53 = scmp.eq.s32.totalorder %s15, 1
      %p54 = scmp.ne.s32.totalorder %s49, %s51
      %p55 = scmp.eq.s32.totalorder %s15, 0
      %p56 = por %p54, %p55
      %p57 = scmp.ne.s32.totalorder %s49, %s51
      %p58 = scmp.eq.s32.totalorder %s20, 1
      %p59 = por %p57, %p58
      %p60 = scmp.ne.s32.totalorder %s51, %s52
      %p61 = scmp.eq.s32.totalorder %s20, 0
      %p62 = por %p60, %p61
      %p63 = scmp.ne.s32.totalorder %s51, %s52
      %p64 = scmp.eq.s32.totalorder %s21, 1
      %p65 = por %p63, %p64
      %p67 = scmp.ne.s32.totalorder %s52, %s66
      %p68 = scmp.eq.s32.totalorder %s21, 0
      %p69 = por %p67, %p68
      %s71 = sadd.s32 %s70, 1
      %p74 = scmp.eq.s32.totalorder %s15, 1
      %p75 = scmp.ne.s32.totalorder %s70, %s72
      %p76 = scmp.eq.s32.totalorder %s15, 0
      %p77 = por %p75, %p76
      %p78 = scmp.ne.s32.totalorder %s70, %s72
      %p79 = scmp.eq.s32.totalorder %s20, 1
      %p80 = por %p78, %p79
      %p81 = scmp.ne.s32.totalorder %s72, %s73
      %p82 = scmp.eq.s32.totalorder %s20, 0
      %p83 = por %p81, %p82
      %p84 = scmp.ne.s32.totalorder %s72, %s73
      %p85 = scmp.eq.s32.totalorder %s21, 1
      %p86 = por %p84, %p85
      %p88 = scmp.ne.s32.totalorder %s73, %s87
      %p89 = scmp.eq.s32.totalorder %s21, 0
      %p90 = por %p88, %p89
      %s91 = ssub.s32 %s15, %s22
      %p92 = scmp.eq.s32.totalorder %s91, 0
      %s94 = sadd.s32 %s93, 1
      %s95 = scalar_select %p92, %s93, %s94
      %p98 = pneg %p92
      %p99 = scmp.eq.s32.totalorder %s15, 1
      %p100 = por %p98, %p99
      %p101 = scmp.ne.s32.totalorder %s93, %s96
      %p102 = scmp.eq.s32.totalorder %s15, 0
      %p103 = por %p101, %p102
      %p104 = scmp.ne.s32.totalorder %s93, %s96
      %p105 = scmp.eq.s32.totalorder %s20, 1
      %p106 = por %p104, %p105
      %p107 = scmp.ne.s32.totalorder %s96, %s97
      %p108 = scmp.eq.s32.totalorder %s20, 0
      %p109 = por %p107, %p108
      %p110 = scmp.ne.s32.totalorder %s96, %s97
      %p111 = scmp.eq.s32.totalorder %s21, 1
      %p112 = por %p110, %p111
      %p114 = scmp.ne.s32.totalorder %s97, %s113
      %p115 = scmp.eq.s32.totalorder %s21, 0
      %p116 = por %p114, %p115
      %p117 = scmp.le.s32.totalorder 1, %s15
      %p118 = scmp.lt.s32.totalorder %s15, 3
      %p119 = pnand %p117, %p118
      %p120 = pneg %p119
      // Predicated region
      $region9: #{tpu_custom_call.1} parent=5 // pred_check
        _
      $region10: #{tpu_custom_call.1} parent=5 // pred_check_branch
        %122 = sbr.rel (%p119) target = $region12
      $region11: #{tpu_custom_call.1} parent=5 // pred_region
        %s123 = ssub.s32 %s15, 1
        // Predicated region
        $region13: #{tpu_custom_call.1} parent=11 // pred_check
          %p124 = pneg %p62
        $region14: #{tpu_custom_call.1} parent=11 // pred_check_branch
          %126 = sbr.rel (%p124) target = $region16
        $region15: #{tpu_custom_call.1} parent=11 // pred_region
          _
        $region16: #{tpu_custom_call.1} parent=11 // pred_fallthru
          _
        // Predicated region
        $region17: #{tpu_custom_call.1} parent=11 // pred_check
          %p127 = pneg %p83
        $region18: #{tpu_custom_call.1} parent=11 // pred_check_branch
          %129 = sbr.rel (%p127) target = $region20
        $region19: #{tpu_custom_call.1} parent=11 // pred_region
          _
        $region20: #{tpu_custom_call.1} parent=11 // pred_fallthru
          _
      $region12: #{tpu_custom_call.1} parent=5 // pred_fallthru
        _
      %p130 = scmp.lt.s32.totalorder %s15, 2
      // Predicated region
      $region21: #{tpu_custom_call.1} parent=5 // pred_check
        %p131 = pneg %p130
      $region22: #{tpu_custom_call.1} parent=5 // pred_check_branch
        %133 = sbr.rel (%p131) target = $region24
      $region23: #{tpu_custom_call.1} parent=5 // pred_region
        // Predicated region
        $region25: #{tpu_custom_call.1} parent=23 // pred_check
          %p134 = pneg %p35
        $region26: #{tpu_custom_call.1} parent=23 // pred_check_branch
          %136 = sbr.rel (%p134) target = $region28
        $region27: #{tpu_custom_call.1} parent=23 // pred_region
          %s137 = sand.u32 %s25, 1
          %s138 = scalar_lea.sflag [#allocation4], %s137
          %s139 = sand.u32 %s25, 1
          %s140 = smul.addr %s139, 16
          %s141 = scalar_lea.vmem [#allocation3], %s140
          %s143 = ssub.s32 256, 256
          %144 = vsyncadd %s138, %s143
          %s145 = smul.addr %s15, 2
          %s146 = smul.addr %s145, 128
          %s147 = scalar_lea.hbm %s0, %s146
          %s149 = sshll.u32 %s141, 4
          %s150 = int_to_ptr.vmem [resolvable:$true] %s149
          %152 = dma.hbm_to_vmem [thread:$0]  %s147, 256, %s150, %s138
        $region28: #{tpu_custom_call.1} parent=23 // pred_fallthru
          _
      $region24: #{tpu_custom_call.1} parent=5 // pred_fallthru
        _
      %p153 = scmp.le.s32.totalorder 1, %s15
      %p154 = scmp.lt.s32.totalorder %s15, 3
      %p155 = pnand %p153, %p154
      %p156 = pneg %p155
      // Predicated region
      $region29: #{tpu_custom_call.1} parent=5 // pred_check
        _
      $region30: #{tpu_custom_call.1} parent=5 // pred_check_branch
        %158 = sbr.rel (%p155) target = $region32
      $region31: #{tpu_custom_call.1} parent=5 // pred_region
        %s159 = ssub.s32 %s15, 1
        %s160 = sand.u32 %s28, 1
        %s161 = scalar_lea.sflag [#allocation4], %s160
        %s162 = sand.u32 %s28, 1
        %s163 = smul.addr %s162, 16
        %s164 = scalar_lea.vmem [#allocation3], %s163
        // Predicated region
        $region33: #{tpu_custom_call.1} parent=31 // pred_check
          %p165 = pneg %p41
        $region34: #{tpu_custom_call.1} parent=31 // pred_check_branch
          %167 = sbr.rel (%p165) target = $region36
        $region35: #{tpu_custom_call.1} parent=31 // pred_region
          %168 = dma.done %s161, 256
        $region36: #{tpu_custom_call.1} parent=31 // pred_fallthru
          _
        %s169 = sand.u32 %s28, 1
        %s170 = scalar_lea.sflag [#allocation4], %s169
        %s171 = sand.u32 %s28, 1
        %s172 = smul.addr %s171, 16
        %s173 = scalar_lea.vmem [#allocation3], %s172
        %p174 = pneg %p41
        %p175 = pneg %p38
        %p176 = pneg %p62
        %p177 = pneg %p59
        %p178 = pneg %p83
        %p179 = pneg %p80
        %p180 = pneg %p109
        %p181 = pneg %p106
        %s182 = sand.u32 %s96, 1
        %s183 = scalar_lea.sflag [#allocation5], %s182
        %s184 = sand.u32 %s96, 1
        %s185 = smul.addr %s184, 16
        %s186 = scalar_lea.vmem [#allocation6], %s185
        %187 = vst [vmem:[#allocation2] sm:$0xff] 0.0
        %188 = vst [vmem:[#allocation2 + $0x8] sm:$0xff] 0.0
        %189 = vst [vmem:[#allocation2 + $0x10] sm:$0xff] 0.0
        %190 = vst [vmem:[#allocation2 + $0x18] sm:$0xff] 0.0
        %191 = vst [vmem:[#allocation2 + $0x20] sm:$0xff] 0.0
        %192 = vst [vmem:[#allocation2 + $0x28] sm:$0xff] 0.0
        %193 = vst [vmem:[#allocation2 + $0x30] sm:$0xff] 0.0
        %194 = vst [vmem:[#allocation2 + $0x38] sm:$0xff] 0.0
        %195 = vst [vmem:[#allocation2 + $0x40] sm:$0xff] 0.0
        %196 = vst [vmem:[#allocation2 + $0x48] sm:$0xff] 0.0
        %197 = vst [vmem:[#allocation2 + $0x50] sm:$0xff] 0.0
        %198 = vst [vmem:[#allocation2 + $0x58] sm:$0xff] 0.0
        %199 = vst [vmem:[#allocation2 + $0x60] sm:$0xff] 0.0
        %200 = vst [vmem:[#allocation2 + $0x68] sm:$0xff] 0.0
        %v201 = vld [vmem:[%s164] sm:$0xff]
        %v202 = vld [vmem:[%s164 + $0x8] sm:$0xff]
        %205 = vrot.lane.b32.xlu0 %v201, 48
        %v206 = vpop.permute.xlu0 %205
        %207 = vrot.lane.b32.xlu0 %v202, 48
        %v208 = vpop.permute.xlu0 %207
        %vm209 = vcmask 392192
        %v210 = vsel %vm209, %v206, %v208
        %vm213 = vcmask 1047936
        %214 = vst.msk [vmem:[#allocation2] sm:$0xff] %vm213, %v206
        %215 = vst [vmem:[#allocation2 + $0x8] sm:$0xff] %v210
        %216 = vrot.lane.b32.xlu0 %v201, 32
        %v217 = vpop.permute.xlu0 %216
        %218 = vrot.lane.b32.xlu0 %v202, 32
        %v219 = vpop.permute.xlu0 %218
        %vm220 = vcmask 261120
        %v221 = vsel %vm220, %v217, %v219
        %vm224 = vcmask 1047808
        %225 = vst.msk [vmem:[#allocation2 + $0x10] sm:$0xff] %vm224, %v217
        %226 = vst [vmem:[#allocation2 + $0x18] sm:$0xff] %v221
        %227 = vrot.lane.b32.xlu0 %v201, 16
        %v228 = vpop.permute.xlu0 %227
        %229 = vrot.lane.b32.xlu0 %v202, 16
        %v230 = vpop.permute.xlu0 %229
        %vm231 = vcmask 130048
        %v232 = vsel %vm231, %v228, %v230
        %vm235 = vcmask 1047680
        %236 = vst.msk [vmem:[#allocation2 + $0x20] sm:$0xff] %vm235, %v228
        %237 = vst [vmem:[#allocation2 + $0x28] sm:$0xff] %v232
        %238 = vst [vmem:[#allocation2 + $0x30] sm:$0xff] %v201
        %239 = vst [vmem:[#allocation2 + $0x38] sm:$0xff] %v202
        %240 = vrot.lane.b32.xlu0 %v201, 112
        %v241 = vpop.permute.xlu0 %240
        %242 = vrot.lane.b32.xlu0 %v202, 112
        %v243 = vpop.permute.xlu0 %242
        %vm244 = vcmask 916480
        %v245 = vsel %vm244, %v241, %v243
        %248 = vst [vmem:[#allocation2 + $0x40] sm:$0xff] %v245
        %249 = vst.msk [vmem:[#allocation2 + $0x48] sm:$0xff] %vm244, %v243
        %250 = vrot.lane.b32.xlu0 %v201, 96
        %v251 = vpop.permute.xlu0 %250
        %252 = vrot.lane.b32.xlu0 %v202, 96
        %v253 = vpop.permute.xlu0 %252
        %vm254 = vcmask 785408
        %v255 = vsel %vm254, %v251, %v253
        %258 = vst [vmem:[#allocation2 + $0x50] sm:$0xff] %v255
        %259 = vst.msk [vmem:[#allocation2 + $0x58] sm:$0xff] %vm254, %v253
        %260 = vrot.lane.b32.xlu0 %v201, 80
        %v261 = vpop.permute.xlu0 %260
        %262 = vrot.lane.b32.xlu0 %v202, 80
        %v263 = vpop.permute.xlu0 %262
        %vm264 = vcmask 654336
        %v265 = vsel %vm264, %v261, %v263
        %268 = vst [vmem:[#allocation2 + $0x60] sm:$0xff] %v265
        %269 = vst.msk [vmem:[#allocation2 + $0x68] sm:$0xff] %vm264, %v263
        %v270 = vld [vmem:[%s1] sm:$0xff]
        %v271 = vld [vmem:[#allocation2] sm:$0xff]
        %v272 = vld [vmem:[#allocation2 + $0x8] sm:$0xff]
        %v273 = vld [vmem:[#allocation2 + $0x10] sm:$0xff]
        %v274 = vld [vmem:[#allocation2 + $0x18] sm:$0xff]
        %v275 = vld [vmem:[#allocation2 + $0x20] sm:$0xff]
        %v276 = vld [vmem:[#allocation2 + $0x28] sm:$0xff]
        %v277 = vld [vmem:[#allocation2 + $0x30] sm:$0xff]
        %v278 = vld [vmem:[#allocation2 + $0x38] sm:$0xff]
        %v279 = vld [vmem:[#allocation2 + $0x40] sm:$0xff]
        %v280 = vld [vmem:[#allocation2 + $0x48] sm:$0xff]
        %v281 = vld [vmem:[#allocation2 + $0x50] sm:$0xff]
        %v282 = vld [vmem:[#allocation2 + $0x58] sm:$0xff]
        %v283 = vld [vmem:[#allocation2 + $0x60] sm:$0xff]
        %v284 = vld [vmem:[#allocation2 + $0x68] sm:$0xff]
        %v285 = vld [vmem:[%s2] sm:$0xff]
        %287 = vset.pattern.permute.xlu0 0
        %288 = vperm.xlu0 %287, %v285
        %v289 = vpop.permute.xlu0 %288
        %vm291 = vcmask 457728
        %v293 = vsel %vm291, %v270, 0
        %295 = vmatprep.subr.mxu0 0.0
        %296 = vmatpush1.msra.mxu0 0.0
        %297 = vmatprep.subr.mxu0 0.0
        %298 = vmatpush1.msra.mxu0 0.0
        %299 = vmatprep.subr.mxu0 0.0
        %300 = vmatpush1.msra.mxu0 0.0
        %301 = vmatprep.subr.mxu0 0.0
        %302 = vmatpush1.msra.mxu0 0.0
        %303 = vmatprep.subr.mxu0 0.0
        %304 = vmatpush1.msra.mxu0 0.0
        %305 = vmatprep.subr.mxu0 0.0
        %306 = vmatpush1.msra.mxu0 0.0
        %307 = vmatprep.subr.mxu0 0.0
        %308 = vmatpush1.msra.mxu0 0.0
        %309 = vmatprep.subr.mxu0 0.0
        %310 = vmatpush1.msra.mxu0 0.0
        %311 = vmatprep.subr.mxu0 0.0
        %312 = vmatpush1.msra.mxu0 0.0
        %313 = vmatprep.subr.mxu0 %v284
        %314 = vmatpush1.msra.mxu0 %v283
        %315 = vmatprep.subr.mxu0 %v282
        %316 = vmatpush1.msra.mxu0 %v281
        %317 = vmatprep.subr.mxu0 %v280
        %318 = vmatpush1.msra.mxu0 %v279
        %319 = vmatprep.subr.mxu0 %v278
        %320 = vmatpush1.msra.mxu0 %v277
        %321 = vmatprep.subr.mxu0 %v276
        %322 = vmatpush1.msra.mxu0 %v275
        %323 = vmatprep.subr.mxu0 %v274
        %324 = vmatpush1.msra.mxu0 %v273
        %325 = vmatprep.subr.mxu0 %v272
        %326 = vmatpush1.msra.mxu0 %v271
        %327 = vmatprep.subr.mxu0 0.0
        %328 = vmatpush2.msra.mxu0 0.0
        %329 = vmatprep.subr.mxu0 0.0
        %330 = vmatpush2.msra.mxu0 0.0
        %331 = vmatprep.subr.mxu0 0.0
        %332 = vmatpush2.msra.mxu0 0.0
        %333 = vmatprep.subr.mxu0 0.0
        %334 = vmatpush2.msra.mxu0 0.0
        %335 = vmatprep.subr.mxu0 0.0
        %336 = vmatpush2.msra.mxu0 0.0
        %337 = vmatprep.subr.mxu0 0.0
        %338 = vmatpush2.msra.mxu0 0.0
        %339 = vmatprep.subr.mxu0 0.0
        %340 = vmatpush2.msra.mxu0 0.0
        %341 = vmatprep.subr.mxu0 0.0
        %342 = vmatpush2.msra.mxu0 0.0
        %343 = vmatprep.subr.mxu0 0.0
        %344 = vmatpush2.msra.mxu0 0.0
        %345 = vmatprep.subr.mxu0 0.0
        %346 = vmatpush2.msra.mxu0 0.0
        %347 = vmatprep.subr.mxu0 0.0
        %348 = vmatpush2.msra.mxu0 0.0
        %349 = vmatprep.subr.mxu0 0.0
        %350 = vmatpush2.msra.mxu0 0.0
        %351 = vmatprep.subr.mxu0 0.0
        %352 = vmatpush2.msra.mxu0 0.0
        %353 = vmatprep.subr.mxu0 0.0
        %354 = vmatpush2.msra.mxu0 0.0
        %355 = vmatprep.subr.mxu0 0.0
        %356 = vmatpush2.msra.mxu0 0.0
        %357 = vmatprep.subr.mxu0 0.0
        %358 = vmatpush2.msra.mxu0 0.0
        %359 = vmatprep.mubr.f32.mxu0 0.0
        %360 = vmatmul.mubr.f32.gmra.mxu0 %v293
        %v361 = vpop.f32.mrf.mxu0
        %v362 = vadd.f32 %v289, %v361
        %v363 = vpop.f32.mrf.mxu0
        %v364 = vadd.f32 %v289, %v363
        %365 = vdwg.mxu0
        %v366 = vxor.u32 %v362, 2147483648
        %v367 = vxor.u32 %v364, 2147483648
        %v368 = vmul.f32 %v366, 1.442695
        %v369 = vpow.pop %v368
        %v370 = vmul.f32 %v367, 1.442695
        %v371 = vpow.pop %v370
        %v372 = vadd.f32 %v369, 1.0
        %v373 = vadd.f32 %v371, 1.0
        %v374 = vrcp.pop %v372
        %v375 = vmul.f32 1.0, %v374
        %v376 = vrcp.pop %v373
        %v377 = vmul.f32 1.0, %v376
        %v378 = vmul.f32 %v362, %v375
        %v379 = vmul.f32 %v364, %v377
        %380 = vst [vmem:[%s186] sm:$0xff] %v378
        %381 = vst [vmem:[%s186 + $0x8] sm:$0xff] %v379
        %s382 = sand.u32 %s96, 1
        %s383 = scalar_lea.sflag [#allocation5], %s382
        %s384 = sand.u32 %s96, 1
        %s385 = smul.addr %s384, 16
        %s386 = scalar_lea.vmem [#allocation6], %s385
        // Predicated region
        $region37: #{tpu_custom_call.1} parent=31 // pred_check
          %p387 = pneg %p106
        $region38: #{tpu_custom_call.1} parent=31 // pred_check_branch
          %389 = sbr.rel (%p387) target = $region40
        $region39: #{tpu_custom_call.1} parent=31 // pred_region
          %s391 = ssub.s32 256, 256
          %392 = vsyncadd %s383, %s391
          %s393 = smul.addr %s20, 2
          %s394 = smul.addr %s393, 128
          %s395 = scalar_lea.hbm %s3, %s394
          %s397 = sshll.u32 %s386, 4
          %s398 = int_to_ptr.vmem [resolvable:$true] %s397
          %400 = dma.vmem_to_hbm [thread:$0]  %s398, 256, %s395, %s383
        $region40: #{tpu_custom_call.1} parent=31 // pred_fallthru
          _
      $region32: #{tpu_custom_call.1} parent=5 // pred_fallthru
        _
      %p401 = scmp.le.s32.totalorder 2, %s15
      // Predicated region
      $region41: #{tpu_custom_call.1} parent=5 // pred_check
        %p402 = pneg %p401
      $region42: #{tpu_custom_call.1} parent=5 // pred_check_branch
        %404 = sbr.rel (%p402) target = $region44
      $region43: #{tpu_custom_call.1} parent=5 // pred_region
        %s405 = ssub.s32 %s15, 2
        // Predicated region
        $region45: #{tpu_custom_call.1} parent=43 // pred_check
          %p406 = pneg %p112
        $region46: #{tpu_custom_call.1} parent=43 // pred_check_branch
          %408 = sbr.rel (%p406) target = $region48
        $region47: #{tpu_custom_call.1} parent=43 // pred_region
          %s409 = sand.u32 %s97, 1
          %s410 = scalar_lea.sflag [#allocation5], %s409
          %s411 = sand.u32 %s97, 1
          %s412 = smul.addr %s411, 16
          %s413 = scalar_lea.vmem [#allocation6], %s412
          %414 = dma.done %s410, 256
        $region48: #{tpu_custom_call.1} parent=43 // pred_fallthru
          _
      $region44: #{tpu_custom_call.1} parent=5 // pred_fallthru
        _
    $region6: #{tpu_custom_call.1} parent=1 // loop_footer
      %s19 = sadd.s32 1, %s15
    $region7: #{tpu_custom_call.1} parent=1 // loop_footer_branch
      %14 = sbr.rel target = $region3
    $region8: #{tpu_custom_call.1} parent=1 // loop_exit
      _
    %415 = vsyncpa [#allocation4], 1
    %s416 = scalar_lea.sflag [#allocation4], 1
    %417 = vsyncpa %s416, 1
    %418 = vsyncpa [#allocation5], 1
    %s419 = scalar_lea.sflag [#allocation5], 1
    %420 = vsyncpa %s419, 1

</llo_original>
